<compile_context>
chip_gen: v7x
topology: tpu7x:2x2x1
jax: 0.10.0
libtpu: 0.0.40
codegen_flags: <defaults>
</compile_context>

<pallas_src>
import functools

import numpy as np
import jax
import jax.numpy as jnp
from jax import lax
from jax.experimental import pallas as pl
from jax.experimental.pallas import tpu as pltpu

EPS = 1e-5  # PyTorch BatchNorm2d default


def resblock_kernel(x_ref, w1_ref, w2_ref, bn_ref, mask_ref, out_ref, *, width):
    """Whole-array VMEM blocks.

    x_ref   : (Cp, S) activations, S = N*H*W on the lane axis, Cp = channels
              padded to a multiple of 8 (padded rows are zero).
    w1_ref  : (Cp, 9*Cp) conv1 weights, tap-major column blocks
              (t = (dh+1)*3 + (dw+1), Cp columns per tap).
    w2_ref  : (Cp, 9*Cp) conv2 weights.
    bn_ref  : (Cp, 4) packed BN params, columns = [gamma1, beta1, gamma2, beta2].
    mask_ref: (9*Cp, S) 0/1 border-validity masks, Cp identical rows per tap.
    out_ref : (Cp, S) output (full sublane + lane dense store).
    """
    Cp, S = x_ref.shape
    inv_s = jnp.float32(1.0 / S)
    taps = [(dh, dw) for dh in (-1, 0, 1) for dw in (-1, 0, 1)]

    x = x_ref[...]          # read once: conv1 source + residual
    mask = mask_ref[...]    # (9*Cp, S)

    def conv3x3(src, w_ref):
        # On-the-fly im2col: 9 lane-rolled copies of `src` stacked on the
        # sublane axis (each block is Cp rows, a multiple of 8 -> aligned
        # concatenate), one border-mask multiply, one MXU contraction over
        # 9*Cp input taps.  roll() brings src[s + d] to position s; the mask
        # zeroes positions whose source pixel lies outside the image (the
        # implicit zero padding of a 'same' conv).
        blocks = []
        for dh, dw in taps:
            d = dh * width + dw                       # flat lane offset of this tap
            blocks.append(src if d == 0
                          else pltpu.roll(src, shift=(-d) % S, axis=1))
        stacked = jnp.concatenate(blocks, axis=0) * mask          # (9*Cp, S)
        return lax.dot_general(
            w_ref[...], stacked,                                   # (Cp,9Cp)@(9Cp,S)
            dimension_numbers=(((1,), (0,)), ((), ())),
            preferred_element_type=jnp.float32)

    def batchnorm(y, col):
        # Training-mode BN over (N, H, W) == the lane axis; one-pass sum / sumsq.
        gamma = bn_ref[:, col:col + 1]                             # (Cp, 1)
        beta = bn_ref[:, col + 1:col + 2]                          # (Cp, 1)
        mean = jnp.sum(y, axis=1, keepdims=True) * inv_s
        ex2 = jnp.sum(y * y, axis=1, keepdims=True) * inv_s
        var = ex2 - mean * mean                                    # biased variance
        scale = gamma * lax.rsqrt(var + EPS)
        return y * scale + (beta - mean * scale)

    h = jnp.maximum(batchnorm(conv3x3(x, w1_ref), 0), 0.0)        # conv1 -> BN1 -> ReLU
    y2 = batchnorm(conv3x3(h, w2_ref), 2)                         # conv2 -> BN2
    out_ref[...] = x + y2                                         # residual add


def residual_block(x_nchw, params):
    """x_nchw: (N, C, H, W) float32; params in PyTorch layouts. Returns (N, C, H, W)."""
    w1, b1, g1, be1, w2, b2, g2, be2 = params
    del b1, b2  # conv biases cancel exactly under training-mode BN (mean subtraction)
    N, C, H, W = x_nchw.shape
    S = N * H * W                    # lane axis; multiple of 128 here -> unmasked stores
    Cp = ((C + 7) // 8) * 8          # pad channels to the sublane multiple

    # Layout plumbing (XLA side): channels on sublanes, flattened (N,H,W) on lanes.
    x_cs = jnp.transpose(x_nchw, (1, 0, 2, 3)).reshape(C, S).astype(jnp.float32)
    x_cs = jnp.pad(x_cs, ((0, Cp - C), (0, 0)))                         # (Cp, S)

    def flat_weight(w):
        # PyTorch OIHW -> (Cp, 9*Cp), tap-major column blocks, zero padding.
        w_ohwi = jnp.transpose(w, (0, 2, 3, 1)).astype(jnp.float32)      # (O, 3, 3, I)
        wp = jnp.zeros((Cp, 3, 3, Cp), jnp.float32).at[:C, :, :, :C].set(w_ohwi)
        return wp.reshape(Cp, 9 * Cp)

    wf1, wf2 = flat_weight(w1), flat_weight(w2)
    bn = jnp.stack([g1, be1, g2, be2], axis=1).astype(jnp.float32)       # (C, 4)
    bn = jnp.pad(bn, ((0, Cp - C), (0, 0)))                              # (Cp, 4)

    # 0/1 border-validity masks per tap (compile-time constants; avoids any padded
    # copy of the activation and any in-kernel integer div/mod), expanded to match
    # the stacked (9*Cp, S) tap layout.
    s = np.arange(S)
    hh, ww = (s // W) % H, s % W
    masks = np.stack([((hh + dh >= 0) & (hh + dh < H) &
                       (ww + dw >= 0) & (ww + dw < W)).astype(np.float32)
                      for dh in (-1, 0, 1) for dw in (-1, 0, 1)])        # (9, S)
    mask_full = jnp.asarray(np.repeat(masks, Cp, axis=0))                # (9*Cp, S)

    vmem = pl.BlockSpec(memory_space=pltpu.MemorySpace.VMEM)
    stack_bytes = 4 * 9 * Cp * S
    vmem_limit = int(min(max(16 * stack_bytes, 8 << 20), 48 << 20))

    out = pl.pallas_call(
        functools.partial(resblock_kernel, width=W),
        out_shape=jax.ShapeDtypeStruct((Cp, S), jnp.float32),
        in_specs=[vmem] * 5,
        out_specs=vmem,
        compiler_params=pltpu.CompilerParams(vmem_limit_bytes=vmem_limit),
    )(x_cs, wf1, wf2, bn, mask_full)

    return jnp.transpose(out[:C].reshape(C, N, H, W), (1, 0, 2, 3))


# ---------------------------- pure-JAX reference -----------------------------
def _ref_forward(x, params):
    """Matches the PyTorch module (training-mode BN; conv biases kept — they cancel)."""
    w1, b1, g1, be1, w2, b2, g2, be2 = params

    def conv(x, w, b):
        y = lax.conv_general_dilated(
            x, w, window_strides=(1, 1), padding="SAME",
            dimension_numbers=("NCHW", "OIHW", "NCHW"))
        return y + b.reshape(1, -1, 1, 1)

    def bn(y, g, be):
        m = jnp.mean(y, axis=(0, 2, 3), keepdims=True)
        v = jnp.mean((y - m) ** 2, axis=(0, 2, 3), keepdims=True)
        return (y - m) / jnp.sqrt(v + EPS) * g.reshape(1, -1, 1, 1) + be.reshape(1, -1, 1, 1)

    h = jnp.maximum(bn(conv(x, w1, b1), g1, be1), 0.0)
    y = bn(conv(h, w2, b2), g2, be2)
    return x + y


if __name__ == "__main__":
    N, C, H, W = 2, 4, 16, 16
    key = jax.random.PRNGKey(0)
    kx, k1, k2, k3, k4, k5, k6 = jax.random.split(key, 7)

    x = jax.random.normal(kx, (N, C, H, W), jnp.float32)

    # PyTorch-layout parameters: Conv2d weight (out, in, kh, kw), bias (out,).
    fan_in = C * 3 * 3
    w1 = jax.random.normal(k1, (C, C, 3, 3), jnp.float32) / jnp.sqrt(fan_in)
    b1 = 0.1 * jax.random.normal(k2, (C,), jnp.float32)
    w2 = jax.random.normal(k3, (C, C, 3, 3), jnp.float32) / jnp.sqrt(fan_in)
    b2 = 0.1 * jax.random.normal(k4, (C,), jnp.float32)
    g1 = 1.0 + 0.1 * jax.random.normal(k5, (C,), jnp.float32)   # BN gamma
    be1 = jnp.zeros((C,), jnp.float32)                          # BN beta
    g2 = 1.0 + 0.1 * jax.random.normal(k6, (C,), jnp.float32)
    be2 = jnp.zeros((C,), jnp.float32)

    params = (w1, b1, g1, be1, w2, b2, g2, be2)

    out = jax.block_until_ready(residual_block(x, params))
    ref = jax.block_until_ready(_ref_forward(x, params))

    assert out.shape == (N, C, H, W)
    err = float(jnp.max(jnp.abs(out - ref)))
    assert jnp.allclose(out, ref, atol=2e-4, rtol=2e-4), f"max abs err {err}"
    print("KERNEL_OK")
</pallas_src>

<mosaic_0001>
module attributes {stable_mosaic.version = 11 : i64} {
  func.func @resblock_kernel(%arg0: memref<8x512xf32, #tpu.memory_space<vmem>>, %arg1: memref<8x72xf32, #tpu.memory_space<vmem>>, %arg2: memref<8x72xf32, #tpu.memory_space<vmem>>, %arg3: memref<8x4xf32, #tpu.memory_space<vmem>>, %arg4: memref<72x512xf32, #tpu.memory_space<vmem>>, %arg5: memref<8x512xf32, #tpu.memory_space<vmem>>) attributes {dimension_semantics = [], scalar_prefetch = 0 : i64, scratch_operands = 0 : i64, tpu.core_type = #tpu.core_type<tc>} {
    %c0 = arith.constant 0 : index
    %c0_0 = arith.constant 0 : index
    %0 = vector.load %arg0[%c0, %c0_0] : memref<8x512xf32, #tpu.memory_space<vmem>>, vector<8x512xf32>
    %c0_1 = arith.constant 0 : index
    %c0_2 = arith.constant 0 : index
    %1 = vector.load %arg4[%c0_1, %c0_2] : memref<72x512xf32, #tpu.memory_space<vmem>>, vector<72x512xf32>
    %c17_i32 = arith.constant 17 : i32
    %2 = tpu.dynamic_rotate %0 by %c17_i32 dim 1 : vector<8x512xf32>, i32 -> vector<8x512xf32>
    %c16_i32 = arith.constant 16 : i32
    %3 = tpu.dynamic_rotate %0 by %c16_i32 dim 1 : vector<8x512xf32>, i32 -> vector<8x512xf32>
    %c15_i32 = arith.constant 15 : i32
    %4 = tpu.dynamic_rotate %0 by %c15_i32 dim 1 : vector<8x512xf32>, i32 -> vector<8x512xf32>
    %c1_i32 = arith.constant 1 : i32
    %5 = tpu.dynamic_rotate %0 by %c1_i32 dim 1 : vector<8x512xf32>, i32 -> vector<8x512xf32>
    %c511_i32 = arith.constant 511 : i32
    %6 = tpu.dynamic_rotate %0 by %c511_i32 dim 1 : vector<8x512xf32>, i32 -> vector<8x512xf32>
    %c497_i32 = arith.constant 497 : i32
    %7 = tpu.dynamic_rotate %0 by %c497_i32 dim 1 : vector<8x512xf32>, i32 -> vector<8x512xf32>
    %c496_i32 = arith.constant 496 : i32
    %8 = tpu.dynamic_rotate %0 by %c496_i32 dim 1 : vector<8x512xf32>, i32 -> vector<8x512xf32>
    %c495_i32 = arith.constant 495 : i32
    %9 = tpu.dynamic_rotate %0 by %c495_i32 dim 1 : vector<8x512xf32>, i32 -> vector<8x512xf32>
    %10 = tpu.concatenate %2, %3, %4, %5, %0, %6, %7, %8, %9 in 0 : vector<8x512xf32>, vector<8x512xf32>, vector<8x512xf32>, vector<8x512xf32>, vector<8x512xf32>, vector<8x512xf32>, vector<8x512xf32>, vector<8x512xf32>, vector<8x512xf32> -> vector<72x512xf32>
    %11 = arith.mulf %10, %1 : vector<72x512xf32>
    %c0_3 = arith.constant 0 : index
    %c0_4 = arith.constant 0 : index
    %12 = vector.load %arg1[%c0_3, %c0_4] : memref<8x72xf32, #tpu.memory_space<vmem>>, vector<8x72xf32>
    %cst = arith.constant dense<0.000000e+00> : vector<8x512xf32>
    %13 = tpu.matmul %12, %11, %cst {dimension_numbers = #tpu.dot_dimension_numbers<[1], [0], [0], [1], [0, 0, 1, 1], [], []>} : vector<8x72xf32>, vector<72x512xf32>, vector<8x512xf32> -> vector<8x512xf32>
    %c0_5 = arith.constant 0 : index
    %c0_6 = arith.constant 0 : index
    %14 = vector.load %arg3[%c0_5, %c0_6] : memref<8x4xf32, #tpu.memory_space<vmem>>, vector<8x1xf32>
    %c0_7 = arith.constant 0 : index
    %c1 = arith.constant 1 : index
    %15 = vector.load %arg3[%c0_7, %c1] : memref<8x4xf32, #tpu.memory_space<vmem>>, vector<8x1xf32>
    %cst_8 = arith.constant dense<0.000000e+00> : vector<8xf32>
    %16 = vector.multi_reduction <add>, %13, %cst_8 [1] : vector<8x512xf32> to vector<8xf32>
    %17 = vector.shape_cast %16 : vector<8xf32> to vector<8x1xf32>
    %cst_9 = arith.constant 0.001953125 : f32
    %18 = vector.broadcast %cst_9 : f32 to vector<8x1xf32>
    %19 = arith.mulf %17, %18 : vector<8x1xf32>
    %20 = arith.mulf %13, %13 : vector<8x512xf32>
    %cst_10 = arith.constant dense<0.000000e+00> : vector<8xf32>
    %21 = vector.multi_reduction <add>, %20, %cst_10 [1] : vector<8x512xf32> to vector<8xf32>
    %22 = vector.shape_cast %21 : vector<8xf32> to vector<8x1xf32>
    %cst_11 = arith.constant 0.001953125 : f32
    %23 = vector.broadcast %cst_11 : f32 to vector<8x1xf32>
    %24 = arith.mulf %22, %23 : vector<8x1xf32>
    %25 = arith.mulf %19, %19 : vector<8x1xf32>
    %26 = arith.subf %24, %25 : vector<8x1xf32>
    %cst_12 = arith.constant 9.99999974E-6 : f32
    %27 = vector.broadcast %cst_12 : f32 to vector<8x1xf32>
    %28 = arith.addf %26, %27 : vector<8x1xf32>
    %29 = math.rsqrt %28 : vector<8x1xf32>
    %30 = arith.mulf %14, %29 : vector<8x1xf32>
    %31 = vector.broadcast %30 : vector<8x1xf32> to vector<8x512xf32>
    %32 = arith.mulf %13, %31 : vector<8x512xf32>
    %33 = arith.mulf %19, %30 : vector<8x1xf32>
    %34 = arith.subf %15, %33 : vector<8x1xf32>
    %35 = vector.broadcast %34 : vector<8x1xf32> to vector<8x512xf32>
    %36 = arith.addf %32, %35 : vector<8x512xf32>
    %cst_13 = arith.constant 0.000000e+00 : f32
    %37 = vector.broadcast %cst_13 : f32 to vector<8x512xf32>
    %38 = arith.maximumf %36, %37 : vector<8x512xf32>
    %c17_i32_14 = arith.constant 17 : i32
    %39 = tpu.dynamic_rotate %38 by %c17_i32_14 dim 1 : vector<8x512xf32>, i32 -> vector<8x512xf32>
    %c16_i32_15 = arith.constant 16 : i32
    %40 = tpu.dynamic_rotate %38 by %c16_i32_15 dim 1 : vector<8x512xf32>, i32 -> vector<8x512xf32>
    %c15_i32_16 = arith.constant 15 : i32
    %41 = tpu.dynamic_rotate %38 by %c15_i32_16 dim 1 : vector<8x512xf32>, i32 -> vector<8x512xf32>
    %c1_i32_17 = arith.constant 1 : i32
    %42 = tpu.dynamic_rotate %38 by %c1_i32_17 dim 1 : vector<8x512xf32>, i32 -> vector<8x512xf32>
    %c511_i32_18 = arith.constant 511 : i32
    %43 = tpu.dynamic_rotate %38 by %c511_i32_18 dim 1 : vector<8x512xf32>, i32 -> vector<8x512xf32>
    %c497_i32_19 = arith.constant 497 : i32
    %44 = tpu.dynamic_rotate %38 by %c497_i32_19 dim 1 : vector<8x512xf32>, i32 -> vector<8x512xf32>
    %c496_i32_20 = arith.constant 496 : i32
    %45 = tpu.dynamic_rotate %38 by %c496_i32_20 dim 1 : vector<8x512xf32>, i32 -> vector<8x512xf32>
    %c495_i32_21 = arith.constant 495 : i32
    %46 = tpu.dynamic_rotate %38 by %c495_i32_21 dim 1 : vector<8x512xf32>, i32 -> vector<8x512xf32>
    %47 = tpu.concatenate %39, %40, %41, %42, %38, %43, %44, %45, %46 in 0 : vector<8x512xf32>, vector<8x512xf32>, vector<8x512xf32>, vector<8x512xf32>, vector<8x512xf32>, vector<8x512xf32>, vector<8x512xf32>, vector<8x512xf32>, vector<8x512xf32> -> vector<72x512xf32>
    %48 = arith.mulf %47, %1 : vector<72x512xf32>
    %c0_22 = arith.constant 0 : index
    %c0_23 = arith.constant 0 : index
    %49 = vector.load %arg2[%c0_22, %c0_23] : memref<8x72xf32, #tpu.memory_space<vmem>>, vector<8x72xf32>
    %cst_24 = arith.constant dense<0.000000e+00> : vector<8x512xf32>
    %50 = tpu.matmul %49, %48, %cst_24 {dimension_numbers = #tpu.dot_dimension_numbers<[1], [0], [0], [1], [0, 0, 1, 1], [], []>} : vector<8x72xf32>, vector<72x512xf32>, vector<8x512xf32> -> vector<8x512xf32>
    %c0_25 = arith.constant 0 : index
    %c2 = arith.constant 2 : index
    %51 = vector.load %arg3[%c0_25, %c2] : memref<8x4xf32, #tpu.memory_space<vmem>>, vector<8x1xf32>
    %c0_26 = arith.constant 0 : index
    %c3 = arith.constant 3 : index
    %52 = vector.load %arg3[%c0_26, %c3] : memref<8x4xf32, #tpu.memory_space<vmem>>, vector<8x1xf32>
    %cst_27 = arith.constant dense<0.000000e+00> : vector<8xf32>
    %53 = vector.multi_reduction <add>, %50, %cst_27 [1] : vector<8x512xf32> to vector<8xf32>
    %54 = vector.shape_cast %53 : vector<8xf32> to vector<8x1xf32>
    %cst_28 = arith.constant 0.001953125 : f32
    %55 = vector.broadcast %cst_28 : f32 to vector<8x1xf32>
    %56 = arith.mulf %54, %55 : vector<8x1xf32>
    %57 = arith.mulf %50, %50 : vector<8x512xf32>
    %cst_29 = arith.constant dense<0.000000e+00> : vector<8xf32>
    %58 = vector.multi_reduction <add>, %57, %cst_29 [1] : vector<8x512xf32> to vector<8xf32>
    %59 = vector.shape_cast %58 : vector<8xf32> to vector<8x1xf32>
    %cst_30 = arith.constant 0.001953125 : f32
    %60 = vector.broadcast %cst_30 : f32 to vector<8x1xf32>
    %61 = arith.mulf %59, %60 : vector<8x1xf32>
    %62 = arith.mulf %56, %56 : vector<8x1xf32>
    %63 = arith.subf %61, %62 : vector<8x1xf32>
    %cst_31 = arith.constant 9.99999974E-6 : f32
    %64 = vector.broadcast %cst_31 : f32 to vector<8x1xf32>
    %65 = arith.addf %63, %64 : vector<8x1xf32>
    %66 = math.rsqrt %65 : vector<8x1xf32>
    %67 = arith.mulf %51, %66 : vector<8x1xf32>
    %68 = vector.broadcast %67 : vector<8x1xf32> to vector<8x512xf32>
    %69 = arith.mulf %50, %68 : vector<8x512xf32>
    %70 = arith.mulf %56, %67 : vector<8x1xf32>
    %71 = arith.subf %52, %70 : vector<8x1xf32>
    %72 = vector.broadcast %71 : vector<8x1xf32> to vector<8x512xf32>
    %73 = arith.addf %69, %72 : vector<8x512xf32>
    %74 = arith.addf %0, %73 : vector<8x512xf32>
    %c0_32 = arith.constant 0 : index
    %c0_33 = arith.constant 0 : index
    %75 = vector.load %arg5[%c0_32, %c0_33] : memref<8x512xf32, #tpu.memory_space<vmem>>, vector<8x512xf32>
    tpu.vector_store %arg5[%c0_32, %c0_33], %74 {strides = array<i32>} : memref<8x512xf32, #tpu.memory_space<vmem>>, vector<8x512xf32>,
    return
  }
}

</mosaic_0001>

<llo_original>
// kernel: tpu_custom_call.1
$region0: #{tpu_custom_call.1}
  #allocation0 [shape = 'u32[]', space=smem, size = 0x4, offset = 0x4, fixed_abs, tag = 'smem constant byte address 0x4 - core index']
  #allocation1 [shape = 'u32[144,128]{1,0:T(1,128)}', space=vmem, size = 0x12000, scoped, tag = 'internal scratch']
  %s0 = inlined_call_operand.hbm [shape: f32[8,512], index: 0, kind: input, shape index: {}]
  %s1 = inlined_call_operand.vmem [shape: f32[8,72], index: 1, kind: input, shape index: {}]
  %s2 = inlined_call_operand.vmem [shape: f32[8,72], index: 2, kind: input, shape index: {}]
  %s3 = inlined_call_operand.vmem [shape: f32[8,4], index: 3, kind: input, shape index: {}]
  %s4 = inlined_call_operand.hbm [shape: f32[72,512], index: 4, kind: input, shape index: {}]
  %s5 = inlined_call_operand.hbm [shape: f32[8,512], index: 5, kind: output, shape index: {}]
  %s6 = sld [smem:[#allocation0]]
  $region38: #{tpu_custom_call.1} parent=0
    _
  %s8 = ssub.s32 1, %s6
  %s9 = scalar_select 0, %s8, %s6
  $region1: #{tpu_custom_call.1} parent=0
    #allocation2 [shape = 'u8[16384]{0}', space=vmem, size = 0x4000, scoped, tag = 'input window, operand 0, single buffered']
    #allocation3 [shape = 's32[1]{0}', space=sflag, size = 0x4, scoped, tag = 'scoped memory for tpu_custom_call.1']
    #allocation4 [shape = 's32[1]{0}', space=sflag, size = 0x4, scoped, tag = 'scoped memory for tpu_custom_call.1']
    #allocation5 [shape = 'u8[147456]{0}', space=vmem, size = 0x24000, scoped, tag = 'input window, operand 4, single buffered']
    #allocation6 [shape = 's32[1]{0}', space=sflag, size = 0x4, scoped, tag = 'scoped memory for tpu_custom_call.1']
    #allocation7 [shape = 'u8[16384]{0}', space=vmem, size = 0x4000, scoped, tag = 'output window, operand 0, single buffered']
    %10 = vsyncpa [#allocation3], 0
    %11 = vsyncpa [#allocation6], 0
    %12 = vsyncpa [#allocation4], 0
    // Predicated region
    $region2: #{tpu_custom_call.1} parent=1 // pred_check
      _
    $region3: #{tpu_custom_call.1} parent=1 // pred_check_branch
      %14 = sbr.rel (0) target = $region5
    $region4: #{tpu_custom_call.1} parent=1 // pred_region
      %s16 = ssub.s32 512, 512
      %17 = vsyncadd [#allocation3], %s16
      %s19 = sshll.u32 [#allocation2], 4
      %s20 = int_to_ptr.vmem [resolvable:$true] %s19
      %22 = dma.hbm_to_vmem [thread:$0]  %s0, 512, %s20, [#allocation3]
    $region5: #{tpu_custom_call.1} parent=1 // pred_fallthru
      _
    // Predicated region
    $region6: #{tpu_custom_call.1} parent=1 // pred_check
      _
    $region7: #{tpu_custom_call.1} parent=1 // pred_check_branch
      %24 = sbr.rel (0) target = $region9
    $region8: #{tpu_custom_call.1} parent=1 // pred_region
      _
    $region9: #{tpu_custom_call.1} parent=1 // pred_fallthru
      _
    // Predicated region
    $region10: #{tpu_custom_call.1} parent=1 // pred_check
      _
    $region11: #{tpu_custom_call.1} parent=1 // pred_check_branch
      %26 = sbr.rel (0) target = $region13
    $region12: #{tpu_custom_call.1} parent=1 // pred_region
      _
    $region13: #{tpu_custom_call.1} parent=1 // pred_fallthru
      _
    // Predicated region
    $region14: #{tpu_custom_call.1} parent=1 // pred_check
      _
    $region15: #{tpu_custom_call.1} parent=1 // pred_check_branch
      %28 = sbr.rel (0) target = $region17
    $region16: #{tpu_custom_call.1} parent=1 // pred_region
      _
    $region17: #{tpu_custom_call.1} parent=1 // pred_fallthru
      _
    // Predicated region
    $region18: #{tpu_custom_call.1} parent=1 // pred_check
      _
    $region19: #{tpu_custom_call.1} parent=1 // pred_check_branch
      %30 = sbr.rel (0) target = $region21
    $region20: #{tpu_custom_call.1} parent=1 // pred_region
      %s32 = ssub.s32 4608, 4608
      %33 = vsyncadd [#allocation6], %s32
      %s34 = sshll.u32 [#allocation5], 4
      %s35 = int_to_ptr.vmem [resolvable:$true] %s34
      %40 = dma.hbm_to_vmem [thread:$0]  %s4, 4608, %s35, [#allocation6], 512, 512, 32
    $region21: #{tpu_custom_call.1} parent=1 // pred_fallthru
      _
    // Predicated region
    $region22: #{tpu_custom_call.1} parent=1 // pred_check
      _
    $region23: #{tpu_custom_call.1} parent=1 // pred_check_branch
      %42 = sbr.rel (0) target = $region25
    $region24: #{tpu_custom_call.1} parent=1 // pred_region
      %43 = dma.done [#allocation3], 512
    $region25: #{tpu_custom_call.1} parent=1 // pred_fallthru
      _
    // Predicated region
    $region26: #{tpu_custom_call.1} parent=1 // pred_check
      _
    $region27: #{tpu_custom_call.1} parent=1 // pred_check_branch
      %45 = sbr.rel (0) target = $region29
    $region28: #{tpu_custom_call.1} parent=1 // pred_region
      %46 = dma.done [#allocation6], 4608
    $region29: #{tpu_custom_call.1} parent=1 // pred_fallthru
      _
    %v47 = vld [vmem:[#allocation2] sm:$0xff]
    %v48 = vld [vmem:[#allocation2 + $0x8] sm:$0xff]
    %v49 = vld [vmem:[#allocation2 + $0x10] sm:$0xff]
    %v50 = vld [vmem:[#allocation2 + $0x18] sm:$0xff]
    %v51 = vld [vmem:[#allocation5] sm:$0xff]
    %v52 = vld [vmem:[#allocation5 + $0x8] sm:$0xff]
    %v53 = vld [vmem:[#allocation5 + $0x10] sm:$0xff]
    %v54 = vld [vmem:[#allocation5 + $0x18] sm:$0xff]
    %v55 = vld [vmem:[#allocation5 + $0x20] sm:$0xff]
    %v56 = vld [vmem:[#allocation5 + $0x28] sm:$0xff]
    %v57 = vld [vmem:[#allocation5 + $0x30] sm:$0xff]
    %v58 = vld [vmem:[#allocation5 + $0x38] sm:$0xff]
    %v59 = vld [vmem:[#allocation5 + $0x40] sm:$0xff]
    %v60 = vld [vmem:[#allocation5 + $0x48] sm:$0xff]
    %v61 = vld [vmem:[#allocation5 + $0x50] sm:$0xff]
    %v62 = vld [vmem:[#allocation5 + $0x58] sm:$0xff]
    %v63 = vld [vmem:[#allocation5 + $0x60] sm:$0xff]
    %v64 = vld [vmem:[#allocation5 + $0x68] sm:$0xff]
    %v65 = vld [vmem:[#allocation5 + $0x70] sm:$0xff]
    %v66 = vld [vmem:[#allocation5 + $0x78] sm:$0xff]
    %v67 = vld [vmem:[#allocation5 + $0x80] sm:$0xff]
    %v68 = vld [vmem:[#allocation5 + $0x88] sm:$0xff]
    %v69 = vld [vmem:[#allocation5 + $0x90] sm:$0xff]
    %v70 = vld [vmem:[#allocation5 + $0x98] sm:$0xff]
    %v71 = vld [vmem:[#allocation5 + $0xa0] sm:$0xff]
    %v72 = vld [vmem:[#allocation5 + $0xa8] sm:$0xff]
    %v73 = vld [vmem:[#allocation5 + $0xb0] sm:$0xff]
    %v74 = vld [vmem:[#allocation5 + $0xb8] sm:$0xff]
    %v75 = vld [vmem:[#allocation5 + $0xc0] sm:$0xff]
    %v76 = vld [vmem:[#allocation5 + $0xc8] sm:$0xff]
    %v77 = vld [vmem:[#allocation5 + $0xd0] sm:$0xff]
    %v78 = vld [vmem:[#allocation5 + $0xd8] sm:$0xff]
    %v79 = vld [vmem:[#allocation5 + $0xe0] sm:$0xff]
    %v80 = vld [vmem:[#allocation5 + $0xe8] sm:$0xff]
    %v81 = vld [vmem:[#allocation5 + $0xf0] sm:$0xff]
    %v82 = vld [vmem:[#allocation5 + $0xf8] sm:$0xff]
    %v83 = vld [vmem:[#allocation5 + $0x100] sm:$0xff]
    %v84 = vld [vmem:[#allocation5 + $0x108] sm:$0xff]
    %v85 = vld [vmem:[#allocation5 + $0x110] sm:$0xff]
    %v86 = vld [vmem:[#allocation5 + $0x118] sm:$0xff]
    %87 = vrot.lane.b32.xlu0 %v47, 17
    %v88 = vpop.permute.xlu0 %87
    %89 = vrot.lane.b32.xlu0 %v48, 17
    %v90 = vpop.permute.xlu0 %89
    %91 = vrot.lane.b32.xlu0 %v49, 17
    %v92 = vpop.permute.xlu0 %91
    %93 = vrot.lane.b32.xlu0 %v50, 17
    %v94 = vpop.permute.xlu0 %93
    %v95 = vlaneseq
    %v96 = vand.u32 %v95, 127
    %vm97 = vcmp.lt.s32.totalorder %v96, 17
    %v98 = vsel %vm97, %v92, %v94
    %v99 = vsel %vm97, %v90, %v92
    %v100 = vsel %vm97, %v88, %v90
    %v101 = vsel %vm97, %v94, %v88
    %102 = vrot.lane.b32.xlu0 %v47, 16
    %v103 = vpop.permute.xlu0 %102
    %104 = vrot.lane.b32.xlu0 %v48, 16
    %v105 = vpop.permute.xlu0 %104
    %106 = vrot.lane.b32.xlu0 %v49, 16
    %v107 = vpop.permute.xlu0 %106
    %108 = vrot.lane.b32.xlu0 %v50, 16
    %v109 = vpop.permute.xlu0 %108
    %vm110 = vcmp.lt.s32.totalorder %v96, 16
    %v111 = vsel %vm110, %v107, %v109
    %v112 = vsel %vm110, %v105, %v107
    %v113 = vsel %vm110, %v103, %v105
    %v114 = vsel %vm110, %v109, %v103
    %115 = vrot.lane.b32.xlu0 %v47, 15
    %v116 = vpop.permute.xlu0 %115
    %117 = vrot.lane.b32.xlu0 %v48, 15
    %v118 = vpop.permute.xlu0 %117
    %119 = vrot.lane.b32.xlu0 %v49, 15
    %v120 = vpop.permute.xlu0 %119
    %121 = vrot.lane.b32.xlu0 %v50, 15
    %v122 = vpop.permute.xlu0 %121
    %vm123 = vcmp.lt.s32.totalorder %v96, 15
    %v124 = vsel %vm123, %v120, %v122
    %v125 = vsel %vm123, %v118, %v120
    %v126 = vsel %vm123, %v116, %v118
    %v127 = vsel %vm123, %v122, %v116
    %128 = vrot.lane.b32.xlu0 %v47, 1
    %v129 = vpop.permute.xlu0 %128
    %130 = vrot.lane.b32.xlu0 %v48, 1
    %v131 = vpop.permute.xlu0 %130
    %132 = vrot.lane.b32.xlu0 %v49, 1
    %v133 = vpop.permute.xlu0 %132
    %134 = vrot.lane.b32.xlu0 %v50, 1
    %v135 = vpop.permute.xlu0 %134
    %vm136 = vcmp.lt.s32.totalorder %v96, 1
    %v137 = vsel %vm136, %v133, %v135
    %v138 = vsel %vm136, %v131, %v133
    %v139 = vsel %vm136, %v129, %v131
    %v140 = vsel %vm136, %v135, %v129
    %141 = vrot.lane.b32.xlu0 %v47, 127
    %v142 = vpop.permute.xlu0 %141
    %143 = vrot.lane.b32.xlu0 %v48, 127
    %v144 = vpop.permute.xlu0 %143
    %145 = vrot.lane.b32.xlu0 %v49, 127
    %v146 = vpop.permute.xlu0 %145
    %147 = vrot.lane.b32.xlu0 %v50, 127
    %v148 = vpop.permute.xlu0 %147
    %vm149 = vcmp.lt.s32.totalorder %v96, 127
    %v150 = vsel %vm149, %v146, %v148
    %v151 = vsel %vm149, %v144, %v146
    %v152 = vsel %vm149, %v142, %v144
    %v153 = vsel %vm149, %v148, %v142
    %154 = vrot.lane.b32.xlu0 %v47, 113
    %v155 = vpop.permute.xlu0 %154
    %156 = vrot.lane.b32.xlu0 %v48, 113
    %v157 = vpop.permute.xlu0 %156
    %158 = vrot.lane.b32.xlu0 %v49, 113
    %v159 = vpop.permute.xlu0 %158
    %160 = vrot.lane.b32.xlu0 %v50, 113
    %v161 = vpop.permute.xlu0 %160
    %vm162 = vcmp.lt.s32.totalorder %v96, 113
    %v163 = vsel %vm162, %v159, %v161
    %v164 = vsel %vm162, %v157, %v159
    %v165 = vsel %vm162, %v155, %v157
    %v166 = vsel %vm162, %v161, %v155
    %167 = vrot.lane.b32.xlu0 %v47, 112
    %v168 = vpop.permute.xlu0 %167
    %169 = vrot.lane.b32.xlu0 %v48, 112
    %v170 = vpop.permute.xlu0 %169
    %171 = vrot.lane.b32.xlu0 %v49, 112
    %v172 = vpop.permute.xlu0 %171
    %173 = vrot.lane.b32.xlu0 %v50, 112
    %v174 = vpop.permute.xlu0 %173
    %vm175 = vcmp.lt.s32.totalorder %v96, 112
    %v176 = vsel %vm175, %v172, %v174
    %v177 = vsel %vm175, %v170, %v172
    %v178 = vsel %vm175, %v168, %v170
    %v179 = vsel %vm175, %v174, %v168
    %180 = vrot.lane.b32.xlu0 %v47, 111
    %v181 = vpop.permute.xlu0 %180
    %182 = vrot.lane.b32.xlu0 %v48, 111
    %v183 = vpop.permute.xlu0 %182
    %184 = vrot.lane.b32.xlu0 %v49, 111
    %v185 = vpop.permute.xlu0 %184
    %186 = vrot.lane.b32.xlu0 %v50, 111
    %v187 = vpop.permute.xlu0 %186
    %vm188 = vcmp.lt.s32.totalorder %v96, 111
    %v189 = vsel %vm188, %v185, %v187
    %v190 = vsel %vm188, %v183, %v185
    %v191 = vsel %vm188, %v181, %v183
    %v192 = vsel %vm188, %v187, %v181
    %v193 = vmul.f32 %v101, %v51
    %v194 = vmul.f32 %v100, %v52
    %v195 = vmul.f32 %v99, %v53
    %v196 = vmul.f32 %v98, %v54
    %v197 = vmul.f32 %v114, %v55
    %v198 = vmul.f32 %v113, %v56
    %v199 = vmul.f32 %v112, %v57
    %v200 = vmul.f32 %v111, %v58
    %v201 = vmul.f32 %v127, %v59
    %v202 = vmul.f32 %v126, %v60
    %v203 = vmul.f32 %v125, %v61
    %v204 = vmul.f32 %v124, %v62
    %v205 = vmul.f32 %v140, %v63
    %v206 = vmul.f32 %v139, %v64
    %v207 = vmul.f32 %v138, %v65
    %v208 = vmul.f32 %v137, %v66
    %v209 = vmul.f32 %v47, %v67
    %v210 = vmul.f32 %v48, %v68
    %v211 = vmul.f32 %v49, %v69
    %v212 = vmul.f32 %v50, %v70
    %v213 = vmul.f32 %v152, %v71
    %v214 = vmul.f32 %v151, %v72
    %v215 = vmul.f32 %v150, %v73
    %v216 = vmul.f32 %v153, %v74
    %v217 = vmul.f32 %v165, %v75
    %v218 = vmul.f32 %v164, %v76
    %v219 = vmul.f32 %v163, %v77
    %v220 = vmul.f32 %v166, %v78
    %v221 = vmul.f32 %v178, %v79
    %v222 = vmul.f32 %v177, %v80
    %v223 = vmul.f32 %v176, %v81
    %v224 = vmul.f32 %v179, %v82
    %v225 = vmul.f32 %v191, %v83
    %v226 = vmul.f32 %v190, %v84
    %v227 = vmul.f32 %v189, %v85
    %v228 = vmul.f32 %v192, %v86
    %v229 = vld [vmem:[%s1] sm:$0xff]
    %vm230 = vcmask 588800
    %v232 = vsel %vm230, %v229, 0
    %234 = vmatprep.subr.mxu0 %v194
    %235 = vmatpush1.msra.mxu0 %v193
    %236 = vmatprep.subr.mxu0 %v198
    %237 = vmatpush1.msra.mxu0 %v197
    %238 = vmatprep.subr.mxu0 %v202
    %239 = vmatpush1.msra.mxu0 %v201
    %240 = vmatprep.subr.mxu0 %v206
    %241 = vmatpush1.msra.mxu0 %v205
    %242 = vmatprep.subr.mxu0 %v210
    %243 = vmatpush1.msra.mxu0 %v209
    %244 = vmatprep.subr.mxu0 %v214
    %245 = vmatpush1.msra.mxu0 %v213
    %246 = vmatprep.subr.mxu0 %v218
    %247 = vmatpush1.msra.mxu0 %v217
    %248 = vmatprep.subr.mxu0 %v222
    %249 = vmatpush1.msra.mxu0 %v221
    %250 = vmatprep.subr.mxu0 %v226
    %251 = vmatpush1.msra.mxu0 %v225
    %252 = vmatprep.subr.mxu0 0.0
    %253 = vmatpush1.msra.mxu0 0.0
    %254 = vmatprep.subr.mxu0 0.0
    %255 = vmatpush1.msra.mxu0 0.0
    %256 = vmatprep.subr.mxu0 0.0
    %257 = vmatpush1.msra.mxu0 0.0
    %258 = vmatprep.subr.mxu0 0.0
    %259 = vmatpush1.msra.mxu0 0.0
    %260 = vmatprep.subr.mxu0 0.0
    %261 = vmatpush1.msra.mxu0 0.0
    %262 = vmatprep.subr.mxu0 0.0
    %263 = vmatpush1.msra.mxu0 0.0
    %264 = vmatprep.subr.mxu0 0.0
    %265 = vmatpush1.msra.mxu0 0.0
    %266 = vmatprep.subr.mxu0 0.0
    %267 = vmatpush1.msra.mxu0 0.0
    %268 = vmatprep.subr.mxu0 0.0
    %269 = vmatpush1.msra.mxu0 0.0
    %270 = vmatprep.subr.mxu0 0.0
    %271 = vmatpush1.msra.mxu0 0.0
    %272 = vmatprep.subr.mxu0 0.0
    %273 = vmatpush1.msra.mxu0 0.0
    %274 = vmatprep.subr.mxu0 0.0
    %275 = vmatpush1.msra.mxu0 0.0
    %276 = vmatprep.subr.mxu0 0.0
    %277 = vmatpush1.msra.mxu0 0.0
    %278 = vmatprep.subr.mxu0 0.0
    %279 = vmatpush1.msra.mxu0 0.0
    %280 = vmatprep.subr.mxu0 0.0
    %281 = vmatpush1.msra.mxu0 0.0
    %282 = vmatprep.subr.mxu0 0.0
    %283 = vmatpush1.msra.mxu0 0.0
    %284 = vmatprep.subr.mxu0 0.0
    %285 = vmatpush1.msra.mxu0 0.0
    %286 = vmatprep.subr.mxu0 0.0
    %287 = vmatpush1.msra.mxu0 0.0
    %288 = vmatprep.subr.mxu0 0.0
    %289 = vmatpush1.msra.mxu0 0.0
    %290 = vmatprep.subr.mxu0 0.0
    %291 = vmatpush1.msra.mxu0 0.0
    %292 = vmatprep.subr.mxu0 0.0
    %293 = vmatpush1.msra.mxu0 0.0
    %294 = vmatprep.subr.mxu0 0.0
    %295 = vmatpush1.msra.mxu0 0.0
    %296 = vmatprep.subr.mxu0 0.0
    %297 = vmatpush1.msra.mxu0 0.0
    %298 = vmatprep.mubr.f32.mxu0 0.0
    %299 = vmatmul.mubr.f32.gmra.mrb[0].mxu0 %v232
    %v300 = vpop.f32.mrb[0].mxu0
    %v301 = vadd.f32 0.0, %v300
    %v302 = vpop.f32.mrb[0].mxu0
    %v303 = vadd.f32 0.0, %v302
    %304 = vdwg.mxu0
    %305 = vmatprep.subr.mxu0 %v196
    %306 = vmatpush1.msra.mxu0 %v195
    %307 = vmatprep.subr.mxu0 %v200
    %308 = vmatpush1.msra.mxu0 %v199
    %309 = vmatprep.subr.mxu0 %v204
    %310 = vmatpush1.msra.mxu0 %v203
    %311 = vmatprep.subr.mxu0 %v208
    %312 = vmatpush1.msra.mxu0 %v207
    %313 = vmatprep.subr.mxu0 %v212
    %314 = vmatpush1.msra.mxu0 %v211
    %315 = vmatprep.subr.mxu0 %v216
    %316 = vmatpush1.msra.mxu0 %v215
    %317 = vmatprep.subr.mxu0 %v220
    %318 = vmatpush1.msra.mxu0 %v219
    %319 = vmatprep.subr.mxu0 %v224
    %320 = vmatpush1.msra.mxu0 %v223
    %321 = vmatprep.subr.mxu0 %v228
    %322 = vmatpush1.msra.mxu0 %v227
    %323 = vmatprep.subr.mxu0 0.0
    %324 = vmatpush1.msra.mxu0 0.0
    %325 = vmatprep.subr.mxu0 0.0
    %326 = vmatpush1.msra.mxu0 0.0
    %327 = vmatprep.subr.mxu0 0.0
    %328 = vmatpush1.msra.mxu0 0.0
    %329 = vmatprep.subr.mxu0 0.0
    %330 = vmatpush1.msra.mxu0 0.0
    %331 = vmatprep.subr.mxu0 0.0
    %332 = vmatpush1.msra.mxu0 0.0
    %333 = vmatprep.subr.mxu0 0.0
    %334 = vmatpush1.msra.mxu0 0.0
    %335 = vmatprep.subr.mxu0 0.0
    %336 = vmatpush1.msra.mxu0 0.0
    %337 = vmatprep.subr.mxu0 0.0
    %338 = vmatpush1.msra.mxu0 0.0
    %339 = vmatprep.subr.mxu0 0.0
    %340 = vmatpush1.msra.mxu0 0.0
    %341 = vmatprep.subr.mxu0 0.0
    %342 = vmatpush1.msra.mxu0 0.0
    %343 = vmatprep.subr.mxu0 0.0
    %344 = vmatpush1.msra.mxu0 0.0
    %345 = vmatprep.subr.mxu0 0.0
    %346 = vmatpush1.msra.mxu0 0.0
    %347 = vmatprep.subr.mxu0 0.0
    %348 = vmatpush1.msra.mxu0 0.0
    %349 = vmatprep.subr.mxu0 0.0
    %350 = vmatpush1.msra.mxu0 0.0
    %351 = vmatprep.subr.mxu0 0.0
    %352 = vmatpush1.msra.mxu0 0.0
    %353 = vmatprep.subr.mxu0 0.0
    %354 = vmatpush1.msra.mxu0 0.0
    %355 = vmatprep.subr.mxu0 0.0
    %356 = vmatpush1.msra.mxu0 0.0
    %357 = vmatprep.subr.mxu0 0.0
    %358 = vmatpush1.msra.mxu0 0.0
    %359 = vmatprep.subr.mxu0 0.0
    %360 = vmatpush1.msra.mxu0 0.0
    %361 = vmatprep.subr.mxu0 0.0
    %362 = vmatpush1.msra.mxu0 0.0
    %363 = vmatprep.subr.mxu0 0.0
    %364 = vmatpush1.msra.mxu0 0.0
    %365 = vmatprep.subr.mxu0 0.0
    %366 = vmatpush1.msra.mxu0 0.0
    %367 = vmatprep.subr.mxu0 0.0
    %368 = vmatpush1.msra.mxu0 0.0
    %369 = vmatprep.mubr.f32.mxu0 0.0
    %370 = vmatmul.mubr.f32.gmra.mrb[0].mxu0 %v232
    %v371 = vpop.f32.mrb[0].mxu0
    %v372 = vadd.f32 0.0, %v371
    %v373 = vpop.f32.mrb[0].mxu0
    %v374 = vadd.f32 0.0, %v373
    %375 = vdwg.mxu0
    %v376 = vld [vmem:[%s3] sm:$0xff]
    %v377 = vadd.f32 %v301, %v303
    %v378 = vadd.f32 %v377, %v372
    %v379 = vadd.f32 %v378, %v374
    %380 = vadd.xlane.f32.xlu0 %v379
    %v381 = vpop.xlane.xlu0 %380
    %v382 = vmul.f32 %v381, 0.001953125
    %v383 = vmul.f32 %v301, %v301
    %v384 = vmul.f32 %v303, %v303
    %v385 = vmul.f32 %v372, %v372
    %v386 = vmul.f32 %v374, %v374
    %v387 = vadd.f32 %v383, %v384
    %v388 = vadd.f32 %v387, %v385
    %v389 = vadd.f32 %v388, %v386
    %390 = vadd.xlane.f32.xlu0 %v389
    %v391 = vpop.xlane.xlu0 %390
    %v392 = vmul.f32 %v391, 0.001953125
    %v393 = vmul.f32 %v382, %v382
    %v394 = vsub.f32 %v392, %v393
    %v395 = vadd.f32 %v394, 1e-05
    %v396 = vrsqrt.pop %v395
    %v397 = vmul.f32 %v376, %v396
    %399 = vset.pattern.permute.xlu0 0
    %400 = vperm.xlu0 %399, %v397
    %v401 = vpop.permute.xlu0 %400
    %v403 = vmul.f32 %v301, %v401
    %v404 = vmul.f32 %v303, %v401
    %v405 = vmul.f32 %v372, %v401
    %v406 = vmul.f32 %v374, %v401
    %v407 = vmul.f32 %v382, %v397
    %409 = vrot.lane.b32.xlu0 %v407, 1
    %v410 = vpop.permute.xlu0 %409
    %v412 = vsub.f32 %v376, %v410
    %414 = vset.pattern.permute.xlu0 1
    %415 = vperm.xlu0 %414, %v412
    %v416 = vpop.permute.xlu0 %415
    %v418 = vadd.f32 %v403, %v416
    %v419 = vadd.f32 %v404, %v416
    %v420 = vadd.f32 %v405, %v416
    %v421 = vadd.f32 %v406, %v416
    %v422 = vmax.f32 %v418, 0.0
    %v423 = vmax.f32 %v419, 0.0
    %v424 = vmax.f32 %v420, 0.0
    %v425 = vmax.f32 %v421, 0.0
    %426 = vrot.lane.b32.xlu0 %v422, 17
    %v427 = vpop.permute.xlu0 %426
    %428 = vrot.lane.b32.xlu0 %v423, 17
    %v429 = vpop.permute.xlu0 %428
    %430 = vrot.lane.b32.xlu0 %v424, 17
    %v431 = vpop.permute.xlu0 %430
    %432 = vrot.lane.b32.xlu0 %v425, 17
    %v433 = vpop.permute.xlu0 %432
    %v434 = vsel %vm97, %v431, %v433
    %v435 = vsel %vm97, %v429, %v431
    %v436 = vsel %vm97, %v427, %v429
    %v437 = vsel %vm97, %v433, %v427
    %438 = vrot.lane.b32.xlu0 %v422, 16
    %v439 = vpop.permute.xlu0 %438
    %440 = vrot.lane.b32.xlu0 %v423, 16
    %v441 = vpop.permute.xlu0 %440
    %442 = vrot.lane.b32.xlu0 %v424, 16
    %v443 = vpop.permute.xlu0 %442
    %444 = vrot.lane.b32.xlu0 %v425, 16
    %v445 = vpop.permute.xlu0 %444
    %v446 = vsel %vm110, %v443, %v445
    %v447 = vsel %vm110, %v441, %v443
    %v448 = vsel %vm110, %v439, %v441
    %v449 = vsel %vm110, %v445, %v439
    %450 = vrot.lane.b32.xlu0 %v422, 15
    %v451 = vpop.permute.xlu0 %450
    %452 = vrot.lane.b32.xlu0 %v423, 15
    %v453 = vpop.permute.xlu0 %452
    %454 = vrot.lane.b32.xlu0 %v424, 15
    %v455 = vpop.permute.xlu0 %454
    %456 = vrot.lane.b32.xlu0 %v425, 15
    %v457 = vpop.permute.xlu0 %456
    %v458 = vsel %vm123, %v455, %v457
    %v459 = vsel %vm123, %v453, %v455
    %v460 = vsel %vm123, %v451, %v453
    %v461 = vsel %vm123, %v457, %v451
    %462 = vrot.lane.b32.xlu0 %v422, 1
    %v463 = vpop.permute.xlu0 %462
    %464 = vrot.lane.b32.xlu0 %v423, 1
    %v465 = vpop.permute.xlu0 %464
    %466 = vrot.lane.b32.xlu0 %v424, 1
    %v467 = vpop.permute.xlu0 %466
    %468 = vrot.lane.b32.xlu0 %v425, 1
    %v469 = vpop.permute.xlu0 %468
    %v470 = vsel %vm136, %v467, %v469
    %v471 = vsel %vm136, %v465, %v467
    %v472 = vsel %vm136, %v463, %v465
    %v473 = vsel %vm136, %v469, %v463
    %474 = vrot.lane.b32.xlu0 %v422, 127
    %v475 = vpop.permute.xlu0 %474
    %476 = vrot.lane.b32.xlu0 %v423, 127
    %v477 = vpop.permute.xlu0 %476
    %478 = vrot.lane.b32.xlu0 %v424, 127
    %v479 = vpop.permute.xlu0 %478
    %480 = vrot.lane.b32.xlu0 %v425, 127
    %v481 = vpop.permute.xlu0 %480
    %v482 = vsel %vm149, %v479, %v481
    %v483 = vsel %vm149, %v477, %v479
    %v484 = vsel %vm149, %v475, %v477
    %v485 = vsel %vm149, %v481, %v475
    %486 = vrot.lane.b32.xlu0 %v422, 113
    %v487 = vpop.permute.xlu0 %486
    %488 = vrot.lane.b32.xlu0 %v423, 113
    %v489 = vpop.permute.xlu0 %488
    %490 = vrot.lane.b32.xlu0 %v424, 113
    %v491 = vpop.permute.xlu0 %490
    %492 = vrot.lane.b32.xlu0 %v425, 113
    %v493 = vpop.permute.xlu0 %492
    %v494 = vsel %vm162, %v491, %v493
    %v495 = vsel %vm162, %v489, %v491
    %v496 = vsel %vm162, %v487, %v489
    %v497 = vsel %vm162, %v493, %v487
    %498 = vrot.lane.b32.xlu0 %v422, 112
    %v499 = vpop.permute.xlu0 %498
    %500 = vrot.lane.b32.xlu0 %v423, 112
    %v501 = vpop.permute.xlu0 %500
    %502 = vrot.lane.b32.xlu0 %v424, 112
    %v503 = vpop.permute.xlu0 %502
    %504 = vrot.lane.b32.xlu0 %v425, 112
    %v505 = vpop.permute.xlu0 %504
    %v506 = vsel %vm175, %v503, %v505
    %v507 = vsel %vm175, %v501, %v503
    %v508 = vsel %vm175, %v499, %v501
    %v509 = vsel %vm175, %v505, %v499
    %510 = vrot.lane.b32.xlu0 %v422, 111
    %v511 = vpop.permute.xlu0 %510
    %512 = vrot.lane.b32.xlu0 %v423, 111
    %v513 = vpop.permute.xlu0 %512
    %514 = vrot.lane.b32.xlu0 %v424, 111
    %v515 = vpop.permute.xlu0 %514
    %516 = vrot.lane.b32.xlu0 %v425, 111
    %v517 = vpop.permute.xlu0 %516
    %v518 = vsel %vm188, %v515, %v517
    %v519 = vsel %vm188, %v513, %v515
    %v520 = vsel %vm188, %v511, %v513
    %v521 = vsel %vm188, %v517, %v511
    %v522 = vmul.f32 %v437, %v51
    %v523 = vmul.f32 %v436, %v52
    %v524 = vmul.f32 %v435, %v53
    %v525 = vmul.f32 %v434, %v54
    %v526 = vmul.f32 %v449, %v55
    %v527 = vmul.f32 %v448, %v56
    %v528 = vmul.f32 %v447, %v57
    %v529 = vmul.f32 %v446, %v58
    %v530 = vmul.f32 %v461, %v59
    %v531 = vmul.f32 %v460, %v60
    %v532 = vmul.f32 %v459, %v61
    %v533 = vmul.f32 %v458, %v62
    %v534 = vmul.f32 %v473, %v63
    %v535 = vmul.f32 %v472, %v64
    %v536 = vmul.f32 %v471, %v65
    %v537 = vmul.f32 %v470, %v66
    %v538 = vmul.f32 %v422, %v67
    %v539 = vmul.f32 %v423, %v68
    %v540 = vmul.f32 %v424, %v69
    %v541 = vmul.f32 %v425, %v70
    %v542 = vmul.f32 %v484, %v71
    %v543 = vmul.f32 %v483, %v72
    %v544 = vmul.f32 %v482, %v73
    %v545 = vmul.f32 %v485, %v74
    %v546 = vmul.f32 %v496, %v75
    %v547 = vmul.f32 %v495, %v76
    %v548 = vmul.f32 %v494, %v77
    %v549 = vmul.f32 %v497, %v78
    %v550 = vmul.f32 %v508, %v79
    %v551 = vmul.f32 %v507, %v80
    %v552 = vmul.f32 %v506, %v81
    %v553 = vmul.f32 %v509, %v82
    %v554 = vmul.f32 %v520, %v83
    %v555 = vmul.f32 %v519, %v84
    %v556 = vmul.f32 %v518, %v85
    %v557 = vmul.f32 %v521, %v86
    %v558 = vld [vmem:[%s2] sm:$0xff]
    %v560 = vsel %vm230, %v558, 0
    %562 = vmatprep.subr.mxu0 %v523
    %563 = vmatpush1.msra.mxu0 %v522
    %564 = vmatprep.subr.mxu0 %v527
    %565 = vmatpush1.msra.mxu0 %v526
    %566 = vmatprep.subr.mxu0 %v531
    %567 = vmatpush1.msra.mxu0 %v530
    %568 = vmatprep.subr.mxu0 %v535
    %569 = vmatpush1.msra.mxu0 %v534
    %570 = vmatprep.subr.mxu0 %v539
    %571 = vmatpush1.msra.mxu0 %v538
    %572 = vmatprep.subr.mxu0 %v543
    %573 = vmatpush1.msra.mxu0 %v542
    %574 = vmatprep.subr.mxu0 %v547
    %575 = vmatpush1.msra.mxu0 %v546
    %576 = vmatprep.subr.mxu0 %v551
    %577 = vmatpush1.msra.mxu0 %v550
    %578 = vmatprep.subr.mxu0 %v555
    %579 = vmatpush1.msra.mxu0 %v554
    %580 = vmatprep.subr.mxu0 0.0
    %581 = vmatpush1.msra.mxu0 0.0
    %582 = vmatprep.subr.mxu0 0.0
    %583 = vmatpush1.msra.mxu0 0.0
    %584 = vmatprep.subr.mxu0 0.0
    %585 = vmatpush1.msra.mxu0 0.0
    %586 = vmatprep.subr.mxu0 0.0
    %587 = vmatpush1.msra.mxu0 0.0
    %588 = vmatprep.subr.mxu0 0.0
    %589 = vmatpush1.msra.mxu0 0.0
    %590 = vmatprep.subr.mxu0 0.0
    %591 = vmatpush1.msra.mxu0 0.0
    %592 = vmatprep.subr.mxu0 0.0
    %593 = vmatpush1.msra.mxu0 0.0
    %594 = vmatprep.subr.mxu0 0.0
    %595 = vmatpush1.msra.mxu0 0.0
    %596 = vmatprep.subr.mxu0 0.0
    %597 = vmatpush1.msra.mxu0 0.0
    %598 = vmatprep.subr.mxu0 0.0
    %599 = vmatpush1.msra.mxu0 0.0
    %600 = vmatprep.subr.mxu0 0.0
    %601 = vmatpush1.msra.mxu0 0.0
    %602 = vmatprep.subr.mxu0 0.0
    %603 = vmatpush1.msra.mxu0 0.0
    %604 = vmatprep.subr.mxu0 0.0
    %605 = vmatpush1.msra.mxu0 0.0
    %606 = vmatprep.subr.mxu0 0.0
    %607 = vmatpush1.msra.mxu0 0.0
    %608 = vmatprep.subr.mxu0 0.0
    %609 = vmatpush1.msra.mxu0 0.0
    %610 = vmatprep.subr.mxu0 0.0
    %611 = vmatpush1.msra.mxu0 0.0
    %612 = vmatprep.subr.mxu0 0.0
    %613 = vmatpush1.msra.mxu0 0.0
    %614 = vmatprep.subr.mxu0 0.0
    %615 = vmatpush1.msra.mxu0 0.0
    %616 = vmatprep.subr.mxu0 0.0
    %617 = vmatpush1.msra.mxu0 0.0
    %618 = vmatprep.subr.mxu0 0.0
    %619 = vmatpush1.msra.mxu0 0.0
    %620 = vmatprep.subr.mxu0 0.0
    %621 = vmatpush1.msra.mxu0 0.0
    %622 = vmatprep.subr.mxu0 0.0
    %623 = vmatpush1.msra.mxu0 0.0
    %624 = vmatprep.subr.mxu0 0.0
    %625 = vmatpush1.msra.mxu0 0.0
    %626 = vmatprep.mubr.f32.mxu0 0.0
    %627 = vmatmul.mubr.f32.gmra.mrb[0].mxu0 %v560
    %v628 = vpop.f32.mrb[0].mxu0
    %v629 = vadd.f32 0.0, %v628
    %v630 = vpop.f32.mrb[0].mxu0
    %v631 = vadd.f32 0.0, %v630
    %632 = vdwg.mxu0
    %633 = vmatprep.subr.mxu0 %v525
    %634 = vmatpush1.msra.mxu0 %v524
    %635 = vmatprep.subr.mxu0 %v529
    %636 = vmatpush1.msra.mxu0 %v528
    %637 = vmatprep.subr.mxu0 %v533
    %638 = vmatpush1.msra.mxu0 %v532
    %639 = vmatprep.subr.mxu0 %v537
    %640 = vmatpush1.msra.mxu0 %v536
    %641 = vmatprep.subr.mxu0 %v541
    %642 = vmatpush1.msra.mxu0 %v540
    %643 = vmatprep.subr.mxu0 %v545
    %644 = vmatpush1.msra.mxu0 %v544
    %645 = vmatprep.subr.mxu0 %v549
    %646 = vmatpush1.msra.mxu0 %v548
    %647 = vmatprep.subr.mxu0 %v553
    %648 = vmatpush1.msra.mxu0 %v552
    %649 = vmatprep.subr.mxu0 %v557
    %650 = vmatpush1.msra.mxu0 %v556
    %651 = vmatprep.subr.mxu0 0.0
    %652 = vmatpush1.msra.mxu0 0.0
    %653 = vmatprep.subr.mxu0 0.0
    %654 = vmatpush1.msra.mxu0 0.0
    %655 = vmatprep.subr.mxu0 0.0
    %656 = vmatpush1.msra.mxu0 0.0
    %657 = vmatprep.subr.mxu0 0.0
    %658 = vmatpush1.msra.mxu0 0.0
    %659 = vmatprep.subr.mxu0 0.0
    %660 = vmatpush1.msra.mxu0 0.0
    %661 = vmatprep.subr.mxu0 0.0
    %662 = vmatpush1.msra.mxu0 0.0
    %663 = vmatprep.subr.mxu0 0.0
    %664 = vmatpush1.msra.mxu0 0.0
    %665 = vmatprep.subr.mxu0 0.0
    %666 = vmatpush1.msra.mxu0 0.0
    %667 = vmatprep.subr.mxu0 0.0
    %668 = vmatpush1.msra.mxu0 0.0
    %669 = vmatprep.subr.mxu0 0.0
    %670 = vmatpush1.msra.mxu0 0.0
    %671 = vmatprep.subr.mxu0 0.0
    %672 = vmatpush1.msra.mxu0 0.0
    %673 = vmatprep.subr.mxu0 0.0
    %674 = vmatpush1.msra.mxu0 0.0
    %675 = vmatprep.subr.mxu0 0.0
    %676 = vmatpush1.msra.mxu0 0.0
    %677 = vmatprep.subr.mxu0 0.0
    %678 = vmatpush1.msra.mxu0 0.0
    %679 = vmatprep.subr.mxu0 0.0
    %680 = vmatpush1.msra.mxu0 0.0
    %681 = vmatprep.subr.mxu0 0.0
    %682 = vmatpush1.msra.mxu0 0.0
    %683 = vmatprep.subr.mxu0 0.0
    %684 = vmatpush1.msra.mxu0 0.0
    %685 = vmatprep.subr.mxu0 0.0
    %686 = vmatpush1.msra.mxu0 0.0
    %687 = vmatprep.subr.mxu0 0.0
    %688 = vmatpush1.msra.mxu0 0.0
    %689 = vmatprep.subr.mxu0 0.0
    %690 = vmatpush1.msra.mxu0 0.0
    %691 = vmatprep.subr.mxu0 0.0
    %692 = vmatpush1.msra.mxu0 0.0
    %693 = vmatprep.subr.mxu0 0.0
    %694 = vmatpush1.msra.mxu0 0.0
    %695 = vmatprep.subr.mxu0 0.0
    %696 = vmatpush1.msra.mxu0 0.0
    %697 = vmatprep.mubr.f32.mxu0 0.0
    %698 = vmatmul.mubr.f32.gmra.mrb[0].mxu0 %v560
    %v699 = vpop.f32.mrb[0].mxu0
    %v700 = vadd.f32 0.0, %v699
    %v701 = vpop.f32.mrb[0].mxu0
    %v702 = vadd.f32 0.0, %v701
    %703 = vdwg.mxu0
    %v704 = vadd.f32 %v629, %v631
    %v705 = vadd.f32 %v704, %v700
    %v706 = vadd.f32 %v705, %v702
    %707 = vadd.xlane.f32.xlu0 %v706
    %v708 = vpop.xlane.xlu0 %707
    %v709 = vmul.f32 %v708, 0.001953125
    %v710 = vmul.f32 %v629, %v629
    %v711 = vmul.f32 %v631, %v631
    %v712 = vmul.f32 %v700, %v700
    %v713 = vmul.f32 %v702, %v702
    %v714 = vadd.f32 %v710, %v711
    %v715 = vadd.f32 %v714, %v712
    %v716 = vadd.f32 %v715, %v713
    %717 = vadd.xlane.f32.xlu0 %v716
    %v718 = vpop.xlane.xlu0 %717
    %v719 = vmul.f32 %v718, 0.001953125
    %v720 = vmul.f32 %v709, %v709
    %v721 = vsub.f32 %v719, %v720
    %v722 = vadd.f32 %v721, 1e-05
    %v723 = vrsqrt.pop %v722
    %v724 = vmul.f32 %v376, %v723
    %726 = vset.pattern.permute.xlu0 2
    %727 = vperm.xlu0 %726, %v724
    %v728 = vpop.permute.xlu0 %727
    %v730 = vmul.f32 %v629, %v728
    %v731 = vmul.f32 %v631, %v728
    %v732 = vmul.f32 %v700, %v728
    %v733 = vmul.f32 %v702, %v728
    %v734 = vmul.f32 %v709, %v724
    %736 = vrot.lane.b32.xlu0 %v734, 1
    %v737 = vpop.permute.xlu0 %736
    %v739 = vsub.f32 %v376, %v737
    %741 = vset.pattern.permute.xlu0 3
    %742 = vperm.xlu0 %741, %v739
    %v743 = vpop.permute.xlu0 %742
    %v745 = vadd.f32 %v730, %v743
    %v746 = vadd.f32 %v731, %v743
    %v747 = vadd.f32 %v732, %v743
    %v748 = vadd.f32 %v733, %v743
    %v749 = vadd.f32 %v47, %v745
    %v750 = vadd.f32 %v48, %v746
    %v751 = vadd.f32 %v49, %v747
    %v752 = vadd.f32 %v50, %v748
    %753 = vst [vmem:[#allocation7] sm:$0xff] %v749
    %754 = vst [vmem:[#allocation7 + $0x8] sm:$0xff] %v750
    %755 = vst [vmem:[#allocation7 + $0x10] sm:$0xff] %v751
    %756 = vst [vmem:[#allocation7 + $0x18] sm:$0xff] %v752
    // Predicated region
    $region30: #{tpu_custom_call.1} parent=1 // pred_check
      _
    $region31: #{tpu_custom_call.1} parent=1 // pred_check_branch
      %758 = sbr.rel (0) target = $region33
    $region32: #{tpu_custom_call.1} parent=1 // pred_region
      %s760 = ssub.s32 512, 512
      %761 = vsyncadd [#allocation4], %s760
      %s763 = sshll.u32 [#allocation7], 4
      %s764 = int_to_ptr.vmem [resolvable:$true] %s763
      %766 = dma.vmem_to_hbm [thread:$0]  %s764, 512, %s5, [#allocation4]
    $region33: #{tpu_custom_call.1} parent=1 // pred_fallthru
      _
    // Predicated region
    $region34: #{tpu_custom_call.1} parent=1 // pred_check
      _
    $region35: #{tpu_custom_call.1} parent=1 // pred_check_branch
      %768 = sbr.rel (0) target = $region37
    $region36: #{tpu_custom_call.1} parent=1 // pred_region
      %769 = dma.done [#allocation4], 512
    $region37: #{tpu_custom_call.1} parent=1 // pred_fallthru
      _
    %770 = vsyncpa [#allocation3], 1
    %771 = vsyncpa [#allocation6], 1
    %772 = vsyncpa [#allocation4], 1

</llo_original>
